<compile_context>
chip_gen: v7x
topology: tpu7x:2x2x1
jax: 0.10.0
libtpu: 0.0.40
codegen_flags: <defaults>
</compile_context>

<pallas_src>
import functools

import jax
import jax.numpy as jnp
from jax.experimental import pallas as pl
from jax.experimental.pallas import tpu as pltpu


def _round_up(a, b):
    return ((a + b - 1) // b) * b


def treelstm_kernel(embeds_ref, maskf_ref,
                    w_pack_ref, b_pack_ref,
                    w_out_ref, b_out_ref,
                    gates_ref, logits_ref):
    emb = embeds_ref[...]                       # [tn, x_size]
    m = maskf_ref[...]                          # [tn, 1] float mask

    # Fused (W_iou | W_f) projection: one lane-dense MXU matmul, then node
    # masking (matches `W_iou(embeds) * mask...` and `W_f(embeds) * mask...`).
    gates = (jnp.dot(emb, w_pack_ref[...], preferred_element_type=jnp.float32)
             + b_pack_ref[...]) * m             # [tn, 4*h] = iou_input | f_input
    gates_ref[...] = gates                      # single lane-dense store

    # ChildSumTreeLSTMCell.apply_node_func with zero accumulated child state.
    h_size = w_pack_ref.shape[1] // 4
    io = jax.nn.sigmoid(gates[:, :2 * h_size])          # dense (i|o) EUP slice
    u_t = jnp.tanh(gates[:, 2 * h_size:3 * h_size])     # u gate
    i_g = io[:, :h_size]
    o_g = io[:, h_size:]
    c = i_g * u_t
    h = o_g * jnp.tanh(c)                                # [tn, h]

    # output_module: Linear(h_size, num_classes), weight zero-padded to 128
    # lanes so the MXU result and the store are unmasked / lane-dense.
    logits_ref[...] = (jnp.dot(h, w_out_ref[...],
                               preferred_element_type=jnp.float32)
                       + b_out_ref[...])                 # [tn, LPAD]


@functools.partial(jax.jit, static_argnames=("tn_max",))
def treelstm_forward(x_ids, mask, emb_table,
                     w_iou, b_iou, w_f, b_f, w_out, b_out, *, tn_max=512):
    """x_ids, mask: int32 [N].

    Returns (logits [N, C], iou_input [N, 3h], f_input [N, h]).
    """
    N = x_ids.shape[0]
    x_size = emb_table.shape[1]
    h = w_f.shape[1]
    C = w_out.shape[1]

    # ---- host-side weight packing -----------------------------------------
    w_pack = jnp.concatenate([w_iou, w_f], axis=1)       # [x_size, 4h]
    b_pack = jnp.concatenate([b_iou, b_f], axis=1)       # [1, 4h]
    lpad = max(128, _round_up(C, 128))
    w_out_p = jnp.pad(w_out, ((0, 0), (0, lpad - C)))    # [h, lpad]
    b_out_p = jnp.pad(b_out, ((0, 0), (0, lpad - C)))    # [1, lpad]

    # ---- node-dimension tiling (+ zero padding so no rows are dropped) ----
    tn = min(tn_max, _round_up(N, 8))
    n_pad = _round_up(N, tn)
    grid = (pl.cdiv(n_pad, tn),)

    ids = (x_ids * mask).astype(jnp.int32)
    ids = jnp.pad(ids, (0, n_pad - N))
    maskf = jnp.pad(mask.astype(jnp.float32), (0, n_pad - N))[:, None]

    # Glue: embedding gather (input_module) done in plain JAX.
    embeds = emb_table[ids]                              # [n_pad, x_size]

    out_shape = (
        jax.ShapeDtypeStruct((n_pad, 4 * h), jnp.float32),   # iou_input|f_input
        jax.ShapeDtypeStruct((n_pad, lpad), jnp.float32),    # padded logits
    )

    gates_all, logits_pad = pl.pallas_call(
        treelstm_kernel,
        out_shape=out_shape,
        grid_spec=pltpu.PrefetchScalarGridSpec(
            num_scalar_prefetch=0,
            grid=grid,
            in_specs=[
                pl.BlockSpec((tn, x_size), lambda i: (i, 0)),     # embeds tile
                pl.BlockSpec((tn, 1), lambda i: (i, 0)),          # mask tile
                pl.BlockSpec((x_size, 4 * h), lambda i: (0, 0)),  # W_iou|W_f ^T
                pl.BlockSpec((1, 4 * h), lambda i: (0, 0)),       # b_iou|b_f
                pl.BlockSpec((h, lpad), lambda i: (0, 0)),        # W_out^T (pad)
                pl.BlockSpec((1, lpad), lambda i: (0, 0)),        # b_out  (pad)
            ],
            out_specs=[
                pl.BlockSpec((tn, 4 * h), lambda i: (i, 0)),
                pl.BlockSpec((tn, lpad), lambda i: (i, 0)),
            ],
        ),
        compiler_params=pltpu.CompilerParams(
            dimension_semantics=("parallel",),
            vmem_limit_bytes=32 * 1024 * 1024,
        ),
    )(embeds, maskf, w_pack, b_pack, w_out_p, b_out_p)

    logits = logits_pad[:N, :C]
    iou_input = gates_all[:N, :3 * h]
    f_input = gates_all[:N, 3 * h:4 * h]
    return logits, iou_input, f_input


if __name__ == "__main__":
    # Small, deterministic configuration (N deliberately not a multiple of 8
    # to exercise the padding path).
    N = 10           # number of tree nodes in the batch
    vocab = 20
    x_size = 32
    h_size = 32
    n_classes = 5

    key = jax.random.PRNGKey(0)
    ks = jax.random.split(key, 8)

    emb_table = jax.random.normal(ks[0], (vocab, x_size), jnp.float32) * 0.1
    # PyTorch Linear weights are [out, in]; stored transposed [in, out].
    w_iou = jax.random.normal(ks[1], (x_size, 3 * h_size), jnp.float32) * 0.1
    b_iou = jax.random.normal(ks[2], (1, 3 * h_size), jnp.float32) * 0.1
    w_f = jax.random.normal(ks[3], (x_size, h_size), jnp.float32) * 0.1
    b_f = jax.random.normal(ks[4], (1, h_size), jnp.float32) * 0.1
    w_out = jax.random.normal(ks[5], (h_size, n_classes), jnp.float32) * 0.1
    b_out = jax.random.normal(ks[6], (1, n_classes), jnp.float32) * 0.1

    x_ids = jax.random.randint(ks[7], (N,), 0, vocab, dtype=jnp.int32)
    mask = (jnp.arange(N) % 2).astype(jnp.int32)  # leaf-node mask

    logits, iou_input, f_input = treelstm_forward(
        x_ids, mask, emb_table, w_iou, b_iou, w_f, b_f, w_out, b_out)
    jax.block_until_ready((logits, iou_input, f_input))

    # Plain-JAX reference for the in-kernel math.
    embeds_ref = emb_table[(x_ids * mask)]
    mf = mask.astype(jnp.float32)[:, None]
    iou_r = (embeds_ref @ w_iou + b_iou) * mf
    f_r = (embeds_ref @ w_f + b_f) * mf
    i_r = jax.nn.sigmoid(iou_r[:, :h_size])
    o_r = jax.nn.sigmoid(iou_r[:, h_size:2 * h_size])
    u_r = jnp.tanh(iou_r[:, 2 * h_size:])
    h_r = o_r * jnp.tanh(i_r * u_r)
    out_r = h_r @ w_out + b_out

    assert jnp.allclose(logits, out_r, atol=1e-5), "logits mismatch"
    assert jnp.allclose(iou_input, iou_r, atol=1e-5), "iou_input mismatch"
    assert jnp.allclose(f_input, f_r, atol=1e-5), "f_input mismatch"

    print("KERNEL_OK")
</pallas_src>

<mosaic_0001>
module attributes {stable_mosaic.version = 11 : i64} {
  func.func @treelstm_kernel(%arg0: i32, %arg1: memref<16x32xf32, #tpu.memory_space<vmem>>, %arg2: memref<16x1xf32, #tpu.memory_space<vmem>>, %arg3: memref<32x128xf32, #tpu.memory_space<vmem>>, %arg4: memref<1x128xf32, #tpu.memory_space<vmem>>, %arg5: memref<32x128xf32, #tpu.memory_space<vmem>>, %arg6: memref<1x128xf32, #tpu.memory_space<vmem>>, %arg7: memref<16x128xf32, #tpu.memory_space<vmem>>, %arg8: memref<16x128xf32, #tpu.memory_space<vmem>>) attributes {dimension_semantics = [#tpu.dimension_semantics<parallel>], iteration_bounds = array<i64: 1>, scalar_prefetch = 0 : i64, scratch_operands = 0 : i64, tpu.core_type = #tpu.core_type<tc>, window_params = [{transform_indices = @transform_0, window_bounds = array<i64: 16, 32>}, {transform_indices = @transform_1, window_bounds = array<i64: 16, 1>}, {pipeline_mode = #tpu.pipeline_mode<synchronous>, transform_indices = @transform_2, window_bounds = array<i64: 32, 128>}, {pipeline_mode = #tpu.pipeline_mode<synchronous>, transform_indices = @transform_3, window_bounds = array<i64: 1, 128>}, {pipeline_mode = #tpu.pipeline_mode<synchronous>, transform_indices = @transform_4, window_bounds = array<i64: 32, 128>}, {pipeline_mode = #tpu.pipeline_mode<synchronous>, transform_indices = @transform_5, window_bounds = array<i64: 1, 128>}, {transform_indices = @transform_6, window_bounds = array<i64: 16, 128>}, {transform_indices = @transform_7, window_bounds = array<i64: 16, 128>}]} {
    %c0 = arith.constant 0 : index
    %c0_0 = arith.constant 0 : index
    %0 = vector.load %arg1[%c0, %c0_0] : memref<16x32xf32, #tpu.memory_space<vmem>>, vector<16x32xf32>
    %c0_1 = arith.constant 0 : index
    %c0_2 = arith.constant 0 : index
    %1 = vector.load %arg2[%c0_1, %c0_2] : memref<16x1xf32, #tpu.memory_space<vmem>>, vector<16x1xf32>
    %c0_3 = arith.constant 0 : index
    %c0_4 = arith.constant 0 : index
    %2 = vector.load %arg3[%c0_3, %c0_4] : memref<32x128xf32, #tpu.memory_space<vmem>>, vector<32x128xf32>
    %cst = arith.constant dense<0.000000e+00> : vector<16x128xf32>
    %3 = tpu.matmul %0, %2, %cst {dimension_numbers = #tpu.dot_dimension_numbers<[1], [0], [0], [1], [0, 0, 1, 1], [], []>} : vector<16x32xf32>, vector<32x128xf32>, vector<16x128xf32> -> vector<16x128xf32>
    %c0_5 = arith.constant 0 : index
    %c0_6 = arith.constant 0 : index
    %4 = vector.load %arg4[%c0_5, %c0_6] : memref<1x128xf32, #tpu.memory_space<vmem>>, vector<1x128xf32>
    %5 = vector.broadcast %4 : vector<1x128xf32> to vector<16x128xf32>
    %6 = arith.addf %3, %5 : vector<16x128xf32>
    %7 = vector.broadcast %1 : vector<16x1xf32> to vector<16x128xf32>
    %8 = arith.mulf %6, %7 : vector<16x128xf32>
    %c0_7 = arith.constant 0 : index
    %c0_8 = arith.constant 0 : index
    %9 = vector.load %arg7[%c0_7, %c0_8] : memref<16x128xf32, #tpu.memory_space<vmem>>, vector<16x128xf32>
    tpu.vector_store %arg7[%c0_7, %c0_8], %8 {strides = array<i32>} : memref<16x128xf32, #tpu.memory_space<vmem>>, vector<16x128xf32>,
    %10 = vector.extract_strided_slice %8 {offsets = [0, 0], sizes = [16, 64], strides = [1, 1]} : vector<16x128xf32> to vector<16x64xf32>
    %11 = arith.negf %10 : vector<16x64xf32>
    %12 = math.exp %11 : vector<16x64xf32>
    %cst_9 = arith.constant 1.000000e+00 : f32
    %13 = vector.broadcast %cst_9 : f32 to vector<16x64xf32>
    %14 = arith.addf %13, %12 : vector<16x64xf32>
    %15 = arith.divf %13, %14 : vector<16x64xf32>
    %16 = vector.extract_strided_slice %8 {offsets = [0, 64], sizes = [16, 32], strides = [1, 1]} : vector<16x128xf32> to vector<16x32xf32>
    %17 = math.tanh %16 : vector<16x32xf32>
    %18 = vector.extract_strided_slice %15 {offsets = [0, 0], sizes = [16, 32], strides = [1, 1]} : vector<16x64xf32> to vector<16x32xf32>
    %19 = vector.extract_strided_slice %15 {offsets = [0, 32], sizes = [16, 32], strides = [1, 1]} : vector<16x64xf32> to vector<16x32xf32>
    %20 = arith.mulf %18, %17 : vector<16x32xf32>
    %21 = math.tanh %20 : vector<16x32xf32>
    %22 = arith.mulf %19, %21 : vector<16x32xf32>
    %c0_10 = arith.constant 0 : index
    %c0_11 = arith.constant 0 : index
    %23 = vector.load %arg5[%c0_10, %c0_11] : memref<32x128xf32, #tpu.memory_space<vmem>>, vector<32x128xf32>
    %cst_12 = arith.constant dense<0.000000e+00> : vector<16x128xf32>
    %24 = tpu.matmul %22, %23, %cst_12 {dimension_numbers = #tpu.dot_dimension_numbers<[1], [0], [0], [1], [0, 0, 1, 1], [], []>} : vector<16x32xf32>, vector<32x128xf32>, vector<16x128xf32> -> vector<16x128xf32>
    %c0_13 = arith.constant 0 : index
    %c0_14 = arith.constant 0 : index
    %25 = vector.load %arg6[%c0_13, %c0_14] : memref<1x128xf32, #tpu.memory_space<vmem>>, vector<1x128xf32>
    %26 = vector.broadcast %25 : vector<1x128xf32> to vector<16x128xf32>
    %27 = arith.addf %24, %26 : vector<16x128xf32>
    %c0_15 = arith.constant 0 : index
    %c0_16 = arith.constant 0 : index
    %28 = vector.load %arg8[%c0_15, %c0_16] : memref<16x128xf32, #tpu.memory_space<vmem>>, vector<16x128xf32>
    tpu.vector_store %arg8[%c0_15, %c0_16], %27 {strides = array<i32>} : memref<16x128xf32, #tpu.memory_space<vmem>>, vector<16x128xf32>,
    return
  }
  func.func @transform_0(%arg0: i32) -> (i32, i32) {
    %c0_i32 = arith.constant 0 : i32
    %c0_i32_0 = arith.constant 0 : i32
    return %arg0, %c0_i32 : i32, i32
  }
  func.func @transform_1(%arg0: i32) -> (i32, i32) {
    %c0_i32 = arith.constant 0 : i32
    %c0_i32_0 = arith.constant 0 : i32
    return %arg0, %c0_i32 : i32, i32
  }
  func.func @transform_2(%arg0: i32) -> (i32, i32) {
    %c0_i32 = arith.constant 0 : i32
    %c0_i32_0 = arith.constant 0 : i32
    %c0_i32_1 = arith.constant 0 : i32
    return %c0_i32, %c0_i32_0 : i32, i32
  }
  func.func @transform_3(%arg0: i32) -> (i32, i32) {
    %c0_i32 = arith.constant 0 : i32
    %c0_i32_0 = arith.constant 0 : i32
    %c0_i32_1 = arith.constant 0 : i32
    return %c0_i32, %c0_i32_0 : i32, i32
  }
  func.func @transform_4(%arg0: i32) -> (i32, i32) {
    %c0_i32 = arith.constant 0 : i32
    %c0_i32_0 = arith.constant 0 : i32
    %c0_i32_1 = arith.constant 0 : i32
    return %c0_i32, %c0_i32_0 : i32, i32
  }
  func.func @transform_5(%arg0: i32) -> (i32, i32) {
    %c0_i32 = arith.constant 0 : i32
    %c0_i32_0 = arith.constant 0 : i32
    %c0_i32_1 = arith.constant 0 : i32
    return %c0_i32, %c0_i32_0 : i32, i32
  }
  func.func @transform_6(%arg0: i32) -> (i32, i32) {
    %c0_i32 = arith.constant 0 : i32
    %c0_i32_0 = arith.constant 0 : i32
    return %arg0, %c0_i32 : i32, i32
  }
  func.func @transform_7(%arg0: i32) -> (i32, i32) {
    %c0_i32 = arith.constant 0 : i32
    %c0_i32_0 = arith.constant 0 : i32
    return %arg0, %c0_i32 : i32, i32
  }
}

</mosaic_0001>

<llo_original>
// kernel: treelstm_forward.1
$region0: #{treelstm_forward.1}
  #allocation0 [shape = 'u32[]', space=smem, size = 0x4, offset = 0x4, fixed_abs, tag = 'smem constant byte address 0x4 - core index']
  #allocation1 [shape = 'u32[144,128]{1,0:T(1,128)}', space=vmem, size = 0x12000, scoped, tag = 'internal scratch']
  %s0 = inlined_call_operand.vmem [shape: f32[16,32], index: 0, kind: input, shape index: {}]
  %s1 = inlined_call_operand.vmem [shape: f32[16,1], index: 1, kind: input, shape index: {}]
  %s2 = inlined_call_operand.vmem [shape: f32[32,128], index: 2, kind: input, shape index: {}]
  %s3 = inlined_call_operand.vmem [shape: f32[1,128], index: 3, kind: input, shape index: {}]
  %s4 = inlined_call_operand.vmem [shape: f32[32,128], index: 4, kind: input, shape index: {}]
  %s5 = inlined_call_operand.vmem [shape: f32[1,128], index: 5, kind: input, shape index: {}]
  %s6 = inlined_call_operand.vmem [shape: f32[16,128], index: 6, kind: output, shape index: {0}]
  %s7 = inlined_call_operand.vmem [shape: f32[16,128], index: 7, kind: output, shape index: {1}]
  %8 = xla_tuple %s6, %s7
  %s9 = sld [smem:[#allocation0]]
  $region42: #{treelstm_forward.1} parent=0
    _
  %s11 = ssub.s32 1, %s9
  %s12 = scalar_select 0, %s11, %s9
  // Predicated region
  $region2: #{treelstm_forward.1} parent=0 // pred_check
    _
  $region3: #{treelstm_forward.1} parent=0 // pred_check_branch
    %14 = sbr.rel (0) target = $region5
  $region4: #{treelstm_forward.1} parent=0 // pred_region
    _
  $region5: #{treelstm_forward.1} parent=0 // pred_fallthru
    _
  // Predicated region
  $region6: #{treelstm_forward.1} parent=0 // pred_check
    _
  $region7: #{treelstm_forward.1} parent=0 // pred_check_branch
    %16 = sbr.rel (0) target = $region9
  $region8: #{treelstm_forward.1} parent=0 // pred_region
    _
  $region9: #{treelstm_forward.1} parent=0 // pred_fallthru
    _
  // Predicated region
  $region10: #{treelstm_forward.1} parent=0 // pred_check
    _
  $region11: #{treelstm_forward.1} parent=0 // pred_check_branch
    %18 = sbr.rel (0) target = $region13
  $region12: #{treelstm_forward.1} parent=0 // pred_region
    _
  $region13: #{treelstm_forward.1} parent=0 // pred_fallthru
    _
  // Predicated region
  $region14: #{treelstm_forward.1} parent=0 // pred_check
    _
  $region15: #{treelstm_forward.1} parent=0 // pred_check_branch
    %20 = sbr.rel (0) target = $region17
  $region16: #{treelstm_forward.1} parent=0 // pred_region
    _
  $region17: #{treelstm_forward.1} parent=0 // pred_fallthru
    _
  // Predicated region
  $region18: #{treelstm_forward.1} parent=0 // pred_check
    _
  $region19: #{treelstm_forward.1} parent=0 // pred_check_branch
    %22 = sbr.rel (0) target = $region21
  $region20: #{treelstm_forward.1} parent=0 // pred_region
    _
  $region21: #{treelstm_forward.1} parent=0 // pred_fallthru
    _
  // Predicated region
  $region22: #{treelstm_forward.1} parent=0 // pred_check
    _
  $region23: #{treelstm_forward.1} parent=0 // pred_check_branch
    %24 = sbr.rel (0) target = $region25
  $region24: #{treelstm_forward.1} parent=0 // pred_region
    _
  $region25: #{treelstm_forward.1} parent=0 // pred_fallthru
    _
  %v25 = vld [vmem:[%s0] sm:$0xff]
  %v26 = vld [vmem:[%s0 + $0x8] sm:$0xff]
  %v27 = vld [vmem:[%s1] sm:$0xff]
  %v28 = vld [vmem:[%s1 + $0x8] sm:$0xff]
  %v29 = vld [vmem:[%s2] sm:$0xff]
  %v30 = vld [vmem:[%s2 + $0x8] sm:$0xff]
  %v31 = vld [vmem:[%s2 + $0x10] sm:$0xff]
  %v32 = vld [vmem:[%s2 + $0x18] sm:$0xff]
  %v33 = vld [vmem:[%s3] sm:$0x1]
  %v35 = vlaneseq
  %v36 = vshrl.u32 %v35, 7
  %v37 = vsub.s32 0, %v36
  %v38 = vrot.slane %v33, %v37
  %vm40 = vcmask 261120
  %v42 = vsel %vm40, %v25, 0
  %v45 = vsel %vm40, %v26, 0
  %47 = vmatprep.subr.mxu0 0.0
  %48 = vmatpush1.msra.mxu0 %v29
  %49 = vmatprep.subr.mxu0 0.0
  %50 = vmatpush1.msra.mxu0 %v30
  %51 = vmatprep.subr.mxu0 0.0
  %52 = vmatpush1.msra.mxu0 %v31
  %53 = vmatprep.subr.mxu0 0.0
  %54 = vmatpush1.msra.mxu0 %v32
  %55 = vmatprep.subr.mxu0 0.0
  %56 = vmatpush1.msra.mxu0 0.0
  %57 = vmatprep.subr.mxu0 0.0
  %58 = vmatpush1.msra.mxu0 0.0
  %59 = vmatprep.subr.mxu0 0.0
  %60 = vmatpush1.msra.mxu0 0.0
  %61 = vmatprep.subr.mxu0 0.0
  %62 = vmatpush1.msra.mxu0 0.0
  %63 = vmatprep.subr.mxu0 0.0
  %64 = vmatpush1.msra.mxu0 0.0
  %65 = vmatprep.subr.mxu0 0.0
  %66 = vmatpush1.msra.mxu0 0.0
  %67 = vmatprep.subr.mxu0 0.0
  %68 = vmatpush1.msra.mxu0 0.0
  %69 = vmatprep.subr.mxu0 0.0
  %70 = vmatpush1.msra.mxu0 0.0
  %71 = vmatprep.subr.mxu0 0.0
  %72 = vmatpush1.msra.mxu0 0.0
  %73 = vmatprep.subr.mxu0 0.0
  %74 = vmatpush1.msra.mxu0 0.0
  %75 = vmatprep.subr.mxu0 0.0
  %76 = vmatpush1.msra.mxu0 0.0
  %77 = vmatprep.subr.mxu0 0.0
  %78 = vmatpush1.msra.mxu0 0.0
  %79 = vmatprep.subr.mxu0 0.0
  %80 = vmatpush1.msra.mxu0 0.0
  %81 = vmatprep.subr.mxu0 0.0
  %82 = vmatpush1.msra.mxu0 0.0
  %83 = vmatprep.subr.mxu0 0.0
  %84 = vmatpush1.msra.mxu0 0.0
  %85 = vmatprep.subr.mxu0 0.0
  %86 = vmatpush1.msra.mxu0 0.0
  %87 = vmatprep.subr.mxu0 0.0
  %88 = vmatpush1.msra.mxu0 0.0
  %89 = vmatprep.subr.mxu0 0.0
  %90 = vmatpush1.msra.mxu0 0.0
  %91 = vmatprep.subr.mxu0 0.0
  %92 = vmatpush1.msra.mxu0 0.0
  %93 = vmatprep.subr.mxu0 0.0
  %94 = vmatpush1.msra.mxu0 0.0
  %95 = vmatprep.subr.mxu0 0.0
  %96 = vmatpush1.msra.mxu0 0.0
  %97 = vmatprep.subr.mxu0 0.0
  %98 = vmatpush1.msra.mxu0 0.0
  %99 = vmatprep.subr.mxu0 0.0
  %100 = vmatpush1.msra.mxu0 0.0
  %101 = vmatprep.subr.mxu0 0.0
  %102 = vmatpush1.msra.mxu0 0.0
  %103 = vmatprep.subr.mxu0 0.0
  %104 = vmatpush1.msra.mxu0 0.0
  %105 = vmatprep.subr.mxu0 0.0
  %106 = vmatpush1.msra.mxu0 0.0
  %107 = vmatprep.subr.mxu0 0.0
  %108 = vmatpush1.msra.mxu0 0.0
  %109 = vmatprep.subr.mxu0 0.0
  %110 = vmatpush1.msra.mxu0 0.0
  %111 = vmatprep.mubr.f32.mxu0 0.0
  %112 = vmatmul.mubr.f32.gmra.mrb[0].mxu0 %v42
  %v113 = vpop.f32.mrb[0].mxu0
  %v114 = vadd.f32 %v38, %v113
  %v115 = vpop.f32.mrb[0].mxu0
  %116 = vmatprep.mubr.f32.mxu0 0.0
  %117 = vmatmul.mubr.f32.gmra.mrb[0].mxu0 %v45
  %v118 = vpop.f32.mrb[0].mxu0
  %v119 = vadd.f32 %v38, %v118
  %v120 = vpop.f32.mrb[0].mxu0
  %121 = vdwg.mxu0
  %123 = vset.pattern.permute.xlu0 0
  %124 = vperm.xlu0 %123, %v27
  %v125 = vpop.permute.xlu0 %124
  %128 = vset.pattern.permute.xlu0 0
  %129 = vperm.xlu0 %128, %v28
  %v130 = vpop.permute.xlu0 %129
  %v132 = vmul.f32 %v114, %v125
  %v133 = vmul.f32 %v119, %v130
  %134 = vst [vmem:[%s6] sm:$0xff] %v132
  %135 = vst [vmem:[%s6 + $0x8] sm:$0xff] %v133
  %v136 = vxor.u32 %v132, 2147483648
  %v137 = vxor.u32 %v133, 2147483648
  %v138 = vmul.f32 %v136, 1.442695
  %v139 = vpow.pop %v138
  %v140 = vmul.f32 %v137, 1.442695
  %v141 = vpow.pop %v140
  %v142 = vadd.f32 %v139, 1.0
  %v143 = vadd.f32 %v141, 1.0
  %v144 = vrcp.pop %v142
  %v145 = vmul.f32 1.0, %v144
  %v146 = vrcp.pop %v143
  %v147 = vmul.f32 1.0, %v146
  %v148 = vtanh.pop %v132
  %v149 = vtanh.pop %v133
  %152 = vrot.lane.b32.xlu0 %v148, 64
  %v153 = vpop.permute.xlu0 %152
  %154 = vrot.lane.b32.xlu0 %v149, 64
  %v155 = vpop.permute.xlu0 %154
  %v158 = vmul.f32 %v145, %v153
  %v159 = vmul.f32 %v147, %v155
  %v160 = vtanh.pop %v158
  %v161 = vtanh.pop %v159
  %164 = vrot.lane.b32.xlu0 %v160, 32
  %v165 = vpop.permute.xlu0 %164
  %166 = vrot.lane.b32.xlu0 %v161, 32
  %v167 = vpop.permute.xlu0 %166
  %v170 = vmul.f32 %v145, %v165
  %v171 = vmul.f32 %v147, %v167
  %v172 = vld [vmem:[%s4] sm:$0xff]
  %v173 = vld [vmem:[%s4 + $0x8] sm:$0xff]
  %v174 = vld [vmem:[%s4 + $0x10] sm:$0xff]
  %v175 = vld [vmem:[%s4 + $0x18] sm:$0xff]
  %v176 = vld [vmem:[%s5] sm:$0x1]
  %v178 = vlaneseq
  %v179 = vshrl.u32 %v178, 7
  %v180 = vsub.s32 0, %v179
  %v181 = vrot.slane %v176, %v180
  %185 = vrot.lane.b32.xlu0 %v170, 96
  %v186 = vpop.permute.xlu0 %185
  %187 = vrot.lane.b32.xlu0 %v171, 96
  %v188 = vpop.permute.xlu0 %187
  %v189 = vsel %vm40, %v186, 0
  %v191 = vsel %vm40, %v188, 0
  %193 = vmatprep.subr.mxu0 0.0
  %194 = vmatpush1.msra.mxu0 %v172
  %195 = vmatprep.subr.mxu0 0.0
  %196 = vmatpush1.msra.mxu0 %v173
  %197 = vmatprep.subr.mxu0 0.0
  %198 = vmatpush1.msra.mxu0 %v174
  %199 = vmatprep.subr.mxu0 0.0
  %200 = vmatpush1.msra.mxu0 %v175
  %201 = vmatprep.subr.mxu0 0.0
  %202 = vmatpush1.msra.mxu0 0.0
  %203 = vmatprep.subr.mxu0 0.0
  %204 = vmatpush1.msra.mxu0 0.0
  %205 = vmatprep.subr.mxu0 0.0
  %206 = vmatpush1.msra.mxu0 0.0
  %207 = vmatprep.subr.mxu0 0.0
  %208 = vmatpush1.msra.mxu0 0.0
  %209 = vmatprep.subr.mxu0 0.0
  %210 = vmatpush1.msra.mxu0 0.0
  %211 = vmatprep.subr.mxu0 0.0
  %212 = vmatpush1.msra.mxu0 0.0
  %213 = vmatprep.subr.mxu0 0.0
  %214 = vmatpush1.msra.mxu0 0.0
  %215 = vmatprep.subr.mxu0 0.0
  %216 = vmatpush1.msra.mxu0 0.0
  %217 = vmatprep.subr.mxu0 0.0
  %218 = vmatpush1.msra.mxu0 0.0
  %219 = vmatprep.subr.mxu0 0.0
  %220 = vmatpush1.msra.mxu0 0.0
  %221 = vmatprep.subr.mxu0 0.0
  %222 = vmatpush1.msra.mxu0 0.0
  %223 = vmatprep.subr.mxu0 0.0
  %224 = vmatpush1.msra.mxu0 0.0
  %225 = vmatprep.subr.mxu0 0.0
  %226 = vmatpush1.msra.mxu0 0.0
  %227 = vmatprep.subr.mxu0 0.0
  %228 = vmatpush1.msra.mxu0 0.0
  %229 = vmatprep.subr.mxu0 0.0
  %230 = vmatpush1.msra.mxu0 0.0
  %231 = vmatprep.subr.mxu0 0.0
  %232 = vmatpush1.msra.mxu0 0.0
  %233 = vmatprep.subr.mxu0 0.0
  %234 = vmatpush1.msra.mxu0 0.0
  %235 = vmatprep.subr.mxu0 0.0
  %236 = vmatpush1.msra.mxu0 0.0
  %237 = vmatprep.subr.mxu0 0.0
  %238 = vmatpush1.msra.mxu0 0.0
  %239 = vmatprep.subr.mxu0 0.0
  %240 = vmatpush1.msra.mxu0 0.0
  %241 = vmatprep.subr.mxu0 0.0
  %242 = vmatpush1.msra.mxu0 0.0
  %243 = vmatprep.subr.mxu0 0.0
  %244 = vmatpush1.msra.mxu0 0.0
  %245 = vmatprep.subr.mxu0 0.0
  %246 = vmatpush1.msra.mxu0 0.0
  %247 = vmatprep.subr.mxu0 0.0
  %248 = vmatpush1.msra.mxu0 0.0
  %249 = vmatprep.subr.mxu0 0.0
  %250 = vmatpush1.msra.mxu0 0.0
  %251 = vmatprep.subr.mxu0 0.0
  %252 = vmatpush1.msra.mxu0 0.0
  %253 = vmatprep.subr.mxu0 0.0
  %254 = vmatpush1.msra.mxu0 0.0
  %255 = vmatprep.subr.mxu0 0.0
  %256 = vmatpush1.msra.mxu0 0.0
  %257 = vmatprep.mubr.f32.mxu0 0.0
  %258 = vmatmul.mubr.f32.gmra.mrb[0].mxu0 %v189
  %v259 = vpop.f32.mrb[0].mxu0
  %v260 = vadd.f32 %v181, %v259
  %v261 = vpop.f32.mrb[0].mxu0
  %262 = vmatprep.mubr.f32.mxu0 0.0
  %263 = vmatmul.mubr.f32.gmra.mrb[0].mxu0 %v191
  %v264 = vpop.f32.mrb[0].mxu0
  %v265 = vadd.f32 %v181, %v264
  %v266 = vpop.f32.mrb[0].mxu0
  %267 = vdwg.mxu0
  %268 = vst [vmem:[%s7] sm:$0xff] %v260
  %269 = vst [vmem:[%s7 + $0x8] sm:$0xff] %v265
  // Predicated region
  $region26: #{treelstm_forward.1} parent=0 // pred_check
    _
  $region27: #{treelstm_forward.1} parent=0 // pred_check_branch
    %271 = sbr.rel (0) target = $region29
  $region28: #{treelstm_forward.1} parent=0 // pred_region
    _
  $region29: #{treelstm_forward.1} parent=0 // pred_fallthru
    _
  // Predicated region
  $region30: #{treelstm_forward.1} parent=0 // pred_check
    _
  $region31: #{treelstm_forward.1} parent=0 // pred_check_branch
    %273 = sbr.rel (0) target = $region33
  $region32: #{treelstm_forward.1} parent=0 // pred_region
    _
  $region33: #{treelstm_forward.1} parent=0 // pred_fallthru
    _
  // Predicated region
  $region34: #{treelstm_forward.1} parent=0 // pred_check
    _
  $region35: #{treelstm_forward.1} parent=0 // pred_check_branch
    %275 = sbr.rel (0) target = $region37
  $region36: #{treelstm_forward.1} parent=0 // pred_region
    _
  $region37: #{treelstm_forward.1} parent=0 // pred_fallthru
    _
  // Predicated region
  $region38: #{treelstm_forward.1} parent=0 // pred_check
    _
  $region39: #{treelstm_forward.1} parent=0 // pred_check_branch
    %277 = sbr.rel (0) target = $region41
  $region40: #{treelstm_forward.1} parent=0 // pred_region
    _
  $region41: #{treelstm_forward.1} parent=0 // pred_fallthru
    _

</llo_original>
